<compile_context>
chip_gen: v5e
topology: v5e:2x2
jax: 0.10.0
libtpu: 0.0.40
codegen_flags: <defaults>
</compile_context>

<pallas_src>
import jax
import jax.numpy as jnp
from jax.experimental import pallas as pl
from jax.experimental.pallas import tpu as pltpu

HIDDEN = 64          # logical hidden width of the PyTorch module
HIDDEN_PAD = 128     # lane-padded hidden width used inside the kernel


def _round_up(x, m):
    return (x + m - 1) // m * m


def critic_kernel(x_ref, w1_ref, b1_ref, w2_ref, b2_ref, w3_ref, b3_ref, out_ref):
    # Load the f32 state tile once, feed the MXU bf16 operands (f32 accumulation).
    x = x_ref[...].astype(jnp.bfloat16)                              # (TB, n_obs) bf16

    # Layer 1: Linear(n_obs, 64->128 padded) + Tanh   (bf16 MXU + f32 EUP)
    h1 = jnp.tanh(
        jnp.dot(x, w1_ref[...], preferred_element_type=jnp.float32) + b1_ref[...]
    )                                                                # (TB, 128) f32

    # Layer 2: Linear(64, 64) padded to 128 + Tanh    (bf16 MXU + f32 EUP)
    h2 = jnp.tanh(
        jnp.dot(h1.astype(jnp.bfloat16), w2_ref[...],
                preferred_element_type=jnp.float32) + b2_ref[...]
    )                                                                # (TB, 128) f32

    # Layer 3: Linear(64, 1).  A 1-column matmul wastes MXU output lanes, so
    # do it as a VPU multiply + cross-lane (XLU) reduce instead.
    v = jnp.sum(h2 * w3_ref[...], axis=-1)                           # (TB,) f32

    # Lane-dense write: one (1, TB) row per grid step (no column of vst.msk).
    out_ref[...] = (v[None, :] + b3_ref[...]).astype(out_ref.dtype)  # (1, TB)


def prepare_params(params):
    """Convert (in, out)-layout 64-hidden params to the padded kernel layout.

    Zero-padding hidden 64 -> 128 is exact: padded weight rows/columns and
    padded bias entries are zero, and tanh(0) = 0, so padded lanes carry 0
    through every layer and contribute nothing to the output.  w1/w2 are
    stored in bf16 (MXU-native); biases and the final row stay f32.
    """
    w1, b1 = params["w1"], params["b1"]           # (n_obs, 64), (1, 64)
    w2, b2 = params["w2"], params["b2"]           # (64, 64),    (1, 64)
    w3, b3 = params["w3"], params["b3"]           # (64, 1),     (1, 1)
    pad = HIDDEN_PAD - w1.shape[1]

    return dict(
        w1=jnp.pad(w1, ((0, 0), (0, pad))).astype(jnp.bfloat16),     # (n_obs, 128) bf16
        b1=jnp.pad(b1, ((0, 0), (0, pad))),                          # (1, 128)     f32
        w2=jnp.pad(w2, ((0, pad), (0, pad))).astype(jnp.bfloat16),   # (128, 128)   bf16
        b2=jnp.pad(b2, ((0, 0), (0, pad))),                          # (1, 128)     f32
        w3=jnp.pad(w3[:, 0], ((0, pad),)).reshape(1, HIDDEN_PAD),    # (1, 128)     f32
        b3=b3.reshape(1, 1),                                         # (1, 1)       f32
    )


def _choose_tiling(B, block_b):
    """Pick (TB, num_tiles) avoiding mostly-padded trailing tiles; keep the
    grid even (>=2) on v7x so both TensorCores get work on large batches."""
    num_tiles = max(1, pl.cdiv(B, block_b))

    try:
        kind = jax.devices()[0].device_kind.lower()
    except Exception:  # pragma: no cover - device query is best-effort
        kind = ""
    if "v7" in kind and B >= 256:
        if num_tiles < 2:
            num_tiles = 2
        elif num_tiles % 2:
            num_tiles += 1

    if num_tiles == 1:
        # Single tile: block equals the (padded) full array, 8-sublane aligned.
        tb = _round_up(B, 8)
    else:
        # Multi-tile: block last dim of the (1, B_pad) output must be a
        # multiple of 128 -> round the tile to 128 rows (adds < 128 rows/tile
        # of padding, negligible vs. block_b-sized tiles).
        tb = _round_up(pl.cdiv(B, num_tiles), 128)
    return tb, num_tiles


def critic_forward(state, kparams, *, block_b=4096):
    """state: (B, n_obs) f32.  kparams: output of prepare_params().  Returns (B, 1)."""
    B, n_obs = state.shape

    TB, num_tiles = _choose_tiling(B, block_b)
    B_pad = TB * num_tiles

    # VMEM budget per step (TB=4096): x double-buffer ~1 MiB (f32) + f32
    # h1/h2 intermediates ~4 MiB + <100 KiB weights -- far under the 32 MiB
    # scoped default on every generation (incl. v7x's 64 MiB physical VMEM).
    x = state if B_pad == B else jnp.pad(state, ((0, B_pad - B), (0, 0)))

    w1, b1, w2, b2, w3, b3 = (kparams["w1"], kparams["b1"], kparams["w2"],
                              kparams["b2"], kparams["w3"], kparams["b3"])

    # Weights/biases: full-array blocks, constant index_map -> resident in VMEM.
    def full(a):
        return pl.BlockSpec(a.shape, lambda i: (0,) * a.ndim)

    cost = pl.CostEstimate(
        flops=2 * B_pad * (n_obs * HIDDEN_PAD + HIDDEN_PAD * HIDDEN_PAD + HIDDEN_PAD),
        transcendentals=2 * B_pad * HIDDEN_PAD,
        bytes_accessed=(4 * x.size + 2 * (w1.size + w2.size)
                        + 4 * (b1.size + b2.size + w3.size + b3.size) + 4 * B_pad),
    )

    out = pl.pallas_call(
        critic_kernel,
        out_shape=jax.ShapeDtypeStruct((1, B_pad), jnp.float32),
        grid=(num_tiles,),
        in_specs=[
            pl.BlockSpec((TB, n_obs), lambda i: (i, 0)),   # state: batch-tiled stream
            full(w1), full(b1), full(w2), full(b2), full(w3), full(b3),
        ],
        out_specs=pl.BlockSpec((1, TB), lambda i: (0, i)),  # lane-dense output rows
        compiler_params=pltpu.CompilerParams(
            dimension_semantics=("parallel",),              # megacore on v7x
        ),
        cost_estimate=cost,
    )(x, w1, b1, w2, b2, w3, b3)

    # Back to the PyTorch (B, 1) layout; row order is preserved (out[0, j] = row j).
    return out[0, :B].reshape(B, 1)


def init_params(key, n_observations, hidden=HIDDEN):
    """Deterministic init mimicking PyTorch nn.Linear default (uniform +/- 1/sqrt(fan_in)).

    PyTorch stores Linear weight as (out, in); we keep the kernel-friendly
    transposed (in, out) layout so the kernel computes x @ W + b directly.
    """
    ks = jax.random.split(key, 6)

    def linear(kw, kb, fan_in, fan_out):
        bound = 1.0 / jnp.sqrt(jnp.float32(fan_in))
        w = jax.random.uniform(kw, (fan_in, fan_out), jnp.float32, -bound, bound)
        b = jax.random.uniform(kb, (1, fan_out), jnp.float32, -bound, bound)
        return w, b

    w1, b1 = linear(ks[0], ks[1], n_observations, hidden)
    w2, b2 = linear(ks[2], ks[3], hidden, hidden)
    w3, b3 = linear(ks[4], ks[5], hidden, 1)
    return {"w1": w1, "b1": b1, "w2": w2, "b2": b2, "w3": w3, "b3": b3}


def critic_forward_ref(state, params):
    """Pure-JAX f32 reference of the same forward pass (unpadded 64-hidden weights)."""
    h1 = jnp.tanh(state @ params["w1"] + params["b1"])
    h2 = jnp.tanh(h1 @ params["w2"] + params["b2"])
    return h2 @ params["w3"] + params["b3"]


if __name__ == "__main__":
    key = jax.random.PRNGKey(0)
    k_param, k_state1, k_state2 = jax.random.split(key, 3)

    n_observations = 32   # small RL observation vector
    params = init_params(k_param, n_observations, hidden=HIDDEN)
    kparams = prepare_params(params)

    # bf16 matmul operands with f32 accumulation -> loosened tolerances vs f32 ref.
    ATOL, RTOL = 3e-2, 3e-2

    # Small-shape run (single tile path).
    state_small = jax.random.normal(k_state1, (8, n_observations), dtype=jnp.float32)
    value_small = jax.block_until_ready(critic_forward(state_small, kparams))
    ref_small = critic_forward_ref(state_small, params)
    assert value_small.shape == (8, 1)
    assert jnp.allclose(value_small, ref_small, atol=ATOL, rtol=RTOL), "small-batch mismatch"

    # Larger ragged batch exercises the tiled grid + padded last tile path.
    state_big = jax.random.normal(k_state2, (1000, n_observations), dtype=jnp.float32)
    value_big = jax.block_until_ready(critic_forward(state_big, kparams, block_b=512))
    ref_big = critic_forward_ref(state_big, params)
    assert value_big.shape == (1000, 1)
    assert jnp.allclose(value_big, ref_big, atol=ATOL, rtol=RTOL), "big-batch mismatch"

    # TODO(synk): optimizer (RMSprop), checkpoint save/load are host-side training
    # utilities with no kernel equivalent; only forward() is implemented.
    print("KERNEL_OK")
</pallas_src>

<mosaic_0001>
module attributes {stable_mosaic.version = 11 : i64} {
  func.func @critic_kernel(%arg0: i32, %arg1: memref<8x32xf32, #tpu.memory_space<vmem>>, %arg2: memref<32x128xbf16, #tpu.memory_space<vmem>>, %arg3: memref<1x128xf32, #tpu.memory_space<vmem>>, %arg4: memref<128x128xbf16, #tpu.memory_space<vmem>>, %arg5: memref<1x128xf32, #tpu.memory_space<vmem>>, %arg6: memref<1x128xf32, #tpu.memory_space<vmem>>, %arg7: memref<1x1xf32, #tpu.memory_space<vmem>>, %arg8: memref<1x8xf32, #tpu.memory_space<vmem>>) attributes {dimension_semantics = [#tpu.dimension_semantics<parallel>], iteration_bounds = array<i64: 1>, scalar_prefetch = 0 : i64, scratch_operands = 0 : i64, tpu.core_type = #tpu.core_type<tc>, window_params = [{transform_indices = @transform_0, window_bounds = array<i64: 8, 32>}, {pipeline_mode = #tpu.pipeline_mode<synchronous>, transform_indices = @transform_1, window_bounds = array<i64: 32, 128>}, {pipeline_mode = #tpu.pipeline_mode<synchronous>, transform_indices = @transform_2, window_bounds = array<i64: 1, 128>}, {pipeline_mode = #tpu.pipeline_mode<synchronous>, transform_indices = @transform_3, window_bounds = array<i64: 128, 128>}, {pipeline_mode = #tpu.pipeline_mode<synchronous>, transform_indices = @transform_4, window_bounds = array<i64: 1, 128>}, {pipeline_mode = #tpu.pipeline_mode<synchronous>, transform_indices = @transform_5, window_bounds = array<i64: 1, 128>}, {pipeline_mode = #tpu.pipeline_mode<synchronous>, transform_indices = @transform_6, window_bounds = array<i64: 1, 1>}, {transform_indices = @transform_7, window_bounds = array<i64: 1, 8>}]} {
    %c0 = arith.constant 0 : index
    %c0_0 = arith.constant 0 : index
    %0 = vector.load %arg1[%c0, %c0_0] : memref<8x32xf32, #tpu.memory_space<vmem>>, vector<8x32xf32>
    %1 = arith.truncf %0 : vector<8x32xf32> to vector<8x32xbf16>
    %c0_1 = arith.constant 0 : index
    %c0_2 = arith.constant 0 : index
    %2 = vector.load %arg2[%c0_1, %c0_2] : memref<32x128xbf16, #tpu.memory_space<vmem>>, vector<32x128xbf16>
    %cst = arith.constant dense<0.000000e+00> : vector<8x128xf32>
    %3 = tpu.matmul %1, %2, %cst {dimension_numbers = #tpu.dot_dimension_numbers<[1], [0], [0], [1], [0, 0, 1, 1], [], []>} : vector<8x32xbf16>, vector<32x128xbf16>, vector<8x128xf32> -> vector<8x128xf32>
    %c0_3 = arith.constant 0 : index
    %c0_4 = arith.constant 0 : index
    %4 = vector.load %arg3[%c0_3, %c0_4] : memref<1x128xf32, #tpu.memory_space<vmem>>, vector<1x128xf32>
    %5 = vector.broadcast %4 : vector<1x128xf32> to vector<8x128xf32>
    %6 = arith.addf %3, %5 : vector<8x128xf32>
    %7 = math.tanh %6 : vector<8x128xf32>
    %8 = arith.truncf %7 : vector<8x128xf32> to vector<8x128xbf16>
    %c0_5 = arith.constant 0 : index
    %c0_6 = arith.constant 0 : index
    %9 = vector.load %arg4[%c0_5, %c0_6] : memref<128x128xbf16, #tpu.memory_space<vmem>>, vector<128x128xbf16>
    %cst_7 = arith.constant dense<0.000000e+00> : vector<8x128xf32>
    %10 = tpu.matmul %8, %9, %cst_7 {dimension_numbers = #tpu.dot_dimension_numbers<[1], [0], [0], [1], [0, 0, 1, 1], [], []>} : vector<8x128xbf16>, vector<128x128xbf16>, vector<8x128xf32> -> vector<8x128xf32>
    %c0_8 = arith.constant 0 : index
    %c0_9 = arith.constant 0 : index
    %11 = vector.load %arg5[%c0_8, %c0_9] : memref<1x128xf32, #tpu.memory_space<vmem>>, vector<1x128xf32>
    %12 = vector.broadcast %11 : vector<1x128xf32> to vector<8x128xf32>
    %13 = arith.addf %10, %12 : vector<8x128xf32>
    %14 = math.tanh %13 : vector<8x128xf32>
    %c0_10 = arith.constant 0 : index
    %c0_11 = arith.constant 0 : index
    %15 = vector.load %arg6[%c0_10, %c0_11] : memref<1x128xf32, #tpu.memory_space<vmem>>, vector<1x128xf32>
    %16 = vector.broadcast %15 : vector<1x128xf32> to vector<8x128xf32>
    %17 = arith.mulf %14, %16 : vector<8x128xf32>
    %cst_12 = arith.constant dense<0.000000e+00> : vector<8xf32>
    %18 = vector.multi_reduction <add>, %17, %cst_12 [1] : vector<8x128xf32> to vector<8xf32>
    %19 = vector.shape_cast %18 : vector<8xf32> to vector<1x8xf32>
    %c0_13 = arith.constant 0 : index
    %c0_14 = arith.constant 0 : index
    %20 = vector.load %arg7[%c0_13, %c0_14] : memref<1x1xf32, #tpu.memory_space<vmem>>, vector<1x1xf32>
    %21 = vector.broadcast %20 : vector<1x1xf32> to vector<1x8xf32>
    %22 = arith.addf %19, %21 : vector<1x8xf32>
    %c0_15 = arith.constant 0 : index
    %c0_16 = arith.constant 0 : index
    %23 = vector.load %arg8[%c0_15, %c0_16] : memref<1x8xf32, #tpu.memory_space<vmem>>, vector<1x8xf32>
    tpu.vector_store %arg8[%c0_15, %c0_16], %22 {strides = array<i32>} : memref<1x8xf32, #tpu.memory_space<vmem>>, vector<1x8xf32>,
    return
  }
  func.func @transform_0(%arg0: i32) -> (i32, i32) {
    %c0_i32 = arith.constant 0 : i32
    %c0_i32_0 = arith.constant 0 : i32
    return %arg0, %c0_i32 : i32, i32
  }
  func.func @transform_1(%arg0: i32) -> (i32, i32) {
    %c0_i32 = arith.constant 0 : i32
    %c0_i32_0 = arith.constant 0 : i32
    %c0_i32_1 = arith.constant 0 : i32
    return %c0_i32, %c0_i32_0 : i32, i32
  }
  func.func @transform_2(%arg0: i32) -> (i32, i32) {
    %c0_i32 = arith.constant 0 : i32
    %c0_i32_0 = arith.constant 0 : i32
    %c0_i32_1 = arith.constant 0 : i32
    return %c0_i32, %c0_i32_0 : i32, i32
  }
  func.func @transform_3(%arg0: i32) -> (i32, i32) {
    %c0_i32 = arith.constant 0 : i32
    %c0_i32_0 = arith.constant 0 : i32
    %c0_i32_1 = arith.constant 0 : i32
    return %c0_i32, %c0_i32_0 : i32, i32
  }
  func.func @transform_4(%arg0: i32) -> (i32, i32) {
    %c0_i32 = arith.constant 0 : i32
    %c0_i32_0 = arith.constant 0 : i32
    %c0_i32_1 = arith.constant 0 : i32
    return %c0_i32, %c0_i32_0 : i32, i32
  }
  func.func @transform_5(%arg0: i32) -> (i32, i32) {
    %c0_i32 = arith.constant 0 : i32
    %c0_i32_0 = arith.constant 0 : i32
    %c0_i32_1 = arith.constant 0 : i32
    return %c0_i32, %c0_i32_0 : i32, i32
  }
  func.func @transform_6(%arg0: i32) -> (i32, i32) {
    %c0_i32 = arith.constant 0 : i32
    %c0_i32_0 = arith.constant 0 : i32
    %c0_i32_1 = arith.constant 0 : i32
    return %c0_i32, %c0_i32_0 : i32, i32
  }
  func.func @transform_7(%arg0: i32) -> (i32, i32) {
    %c0_i32 = arith.constant 0 : i32
    %c0_i32_0 = arith.constant 0 : i32
    return %c0_i32, %arg0 : i32, i32
  }
}

</mosaic_0001>

<llo_original>
// kernel: tpu_custom_call.1
$region0: #{tpu_custom_call.1}
  #allocation0 [shape = 'u32[]', space=smem, size = 0x4, offset = 0x4, fixed_abs, tag = 'smem constant byte address 0x4 - core index']
  #allocation1 [shape = 'u32[72,128]{1,0:T(1,128)}', space=vmem, size = 0x9000, scoped, tag = 'internal scratch']
  #allocation2 [shape = 'f32[1,1]{1,0:T(1,128)S(1)}', space=vmem, size = 0x200, scoped, tag = 'scoped memory for tpu_custom_call.1']
  %s0 = inlined_call_operand.hbm [shape: f32[8,32], index: 0, kind: input, shape index: {}]
  %s1 = inlined_call_operand.hbm [shape: bf16[32,128], index: 1, kind: input, shape index: {}]
  %s2 = inlined_call_operand.vmem [shape: f32[1,128], index: 2, kind: input, shape index: {}]
  %s3 = inlined_call_operand.hbm [shape: bf16[128,128], index: 3, kind: input, shape index: {}]
  %s4 = inlined_call_operand.vmem [shape: f32[1,128], index: 4, kind: input, shape index: {}]
  %s5 = inlined_call_operand.vmem [shape: f32[1,128], index: 5, kind: input, shape index: {}]
  %s6 = inlined_call_operand.<no memory space> [shape: f32[1,1], index: 6, kind: input, shape index: {}]
  %s7 = inlined_call_operand.hbm [shape: f32[1,8], index: 7, kind: output, shape index: {}]
  %s8 = sld [smem:[#allocation0]]
  $region50: #{tpu_custom_call.1} parent=0
    _
  %s10 = ssub.s32 1, %s8
  %s11 = scalar_select 0, %s10, %s8
  %v12 = vstv %s6
  %13 = vst [vmem:[#allocation2] sm:$0x1] %v12
  $region1: #{tpu_custom_call.1} parent=0
    #allocation3 [shape = 'u8[4096]{0}', space=vmem, size = 0x1000, scoped, tag = 'input window, operand 0, single buffered']
    #allocation4 [shape = 's32[1]{0}', space=sflag, size = 0x4, scoped, tag = 'scoped memory for tpu_custom_call.1']
    #allocation5 [shape = 's32[1]{0}', space=sflag, size = 0x4, scoped, tag = 'scoped memory for tpu_custom_call.1']
    #allocation6 [shape = 'u8[8192]{0}', space=vmem, size = 0x2000, scoped, tag = 'input window, operand 1, single buffered']
    #allocation7 [shape = 's32[1]{0}', space=sflag, size = 0x4, scoped, tag = 'scoped memory for tpu_custom_call.1']
    #allocation8 [shape = 'u8[32768]{0}', space=vmem, size = 0x8000, scoped, tag = 'input window, operand 3, single buffered']
    #allocation9 [shape = 'u8[512]{0}', space=vmem, size = 0x400, scoped, tag = 'output window, operand 0, single buffered']
    %14 = vsyncpa [#allocation4], 0
    %15 = vsyncpa [#allocation7], 0
    %16 = vsyncpa [#allocation5], 0
    // Predicated region
    $region2: #{tpu_custom_call.1} parent=1 // pred_check
      _
    $region3: #{tpu_custom_call.1} parent=1 // pred_check_branch
      %18 = sbr.rel (0) target = $region5
    $region4: #{tpu_custom_call.1} parent=1 // pred_region
      %20 = vsyncadd [#allocation4], 0
      %s22 = sshll.u32 %s0, 4
      %s23 = int_to_ptr.hbm [resolvable:$true] %s22
      %s24 = sshll.u32 [#allocation3], 4
      %s25 = int_to_ptr.vmem [resolvable:$true] %s24
      %27 = dma.hbm_to_vmem [thread:$0]  %s23, 128, %s25, [#allocation4]
    $region5: #{tpu_custom_call.1} parent=1 // pred_fallthru
      _
    // Predicated region
    $region6: #{tpu_custom_call.1} parent=1 // pred_check
      _
    $region7: #{tpu_custom_call.1} parent=1 // pred_check_branch
      %29 = sbr.rel (0) target = $region9
    $region8: #{tpu_custom_call.1} parent=1 // pred_region
      %31 = vsyncadd [#allocation7], 0
      %s32 = sshll.u32 %s1, 4
      %s33 = int_to_ptr.hbm [resolvable:$true] %s32
      %s34 = sshll.u32 [#allocation6], 4
      %s35 = int_to_ptr.vmem [resolvable:$true] %s34
      %40 = dma.hbm_to_vmem [thread:$0]  %s33, 256, %s35, [#allocation7], 64, 64, 4
    $region9: #{tpu_custom_call.1} parent=1 // pred_fallthru
      _
    // Predicated region
    $region10: #{tpu_custom_call.1} parent=1 // pred_check
      _
    $region11: #{tpu_custom_call.1} parent=1 // pred_check_branch
      %42 = sbr.rel (0) target = $region13
    $region12: #{tpu_custom_call.1} parent=1 // pred_region
      _
    $region13: #{tpu_custom_call.1} parent=1 // pred_fallthru
      _
    // Predicated region
    $region14: #{tpu_custom_call.1} parent=1 // pred_check
      _
    $region15: #{tpu_custom_call.1} parent=1 // pred_check_branch
      %44 = sbr.rel (0) target = $region17
    $region16: #{tpu_custom_call.1} parent=1 // pred_region
      %46 = vsyncadd [#allocation7], 0
      %s47 = sshll.u32 %s3, 4
      %s48 = int_to_ptr.hbm [resolvable:$true] %s47
      %s49 = sshll.u32 [#allocation8], 4
      %s50 = int_to_ptr.vmem [resolvable:$true] %s49
      %55 = dma.hbm_to_vmem [thread:$0]  %s48, 1024, %s50, [#allocation7], 64, 64, 4
    $region17: #{tpu_custom_call.1} parent=1 // pred_fallthru
      _
    // Predicated region
    $region18: #{tpu_custom_call.1} parent=1 // pred_check
      _
    $region19: #{tpu_custom_call.1} parent=1 // pred_check_branch
      %57 = sbr.rel (0) target = $region21
    $region20: #{tpu_custom_call.1} parent=1 // pred_region
      _
    $region21: #{tpu_custom_call.1} parent=1 // pred_fallthru
      _
    // Predicated region
    $region22: #{tpu_custom_call.1} parent=1 // pred_check
      _
    $region23: #{tpu_custom_call.1} parent=1 // pred_check_branch
      %59 = sbr.rel (0) target = $region25
    $region24: #{tpu_custom_call.1} parent=1 // pred_region
      _
    $region25: #{tpu_custom_call.1} parent=1 // pred_fallthru
      _
    // Predicated region
    $region26: #{tpu_custom_call.1} parent=1 // pred_check
      _
    $region27: #{tpu_custom_call.1} parent=1 // pred_check_branch
      %61 = sbr.rel (0) target = $region29
    $region28: #{tpu_custom_call.1} parent=1 // pred_region
      _
    $region29: #{tpu_custom_call.1} parent=1 // pred_fallthru
      _
    // Predicated region
    $region30: #{tpu_custom_call.1} parent=1 // pred_check
      _
    $region31: #{tpu_custom_call.1} parent=1 // pred_check_branch
      %63 = sbr.rel (0) target = $region33
    $region32: #{tpu_custom_call.1} parent=1 // pred_region
      %65 = dma.done [#allocation4], 128
    $region33: #{tpu_custom_call.1} parent=1 // pred_fallthru
      _
    // Predicated region
    $region34: #{tpu_custom_call.1} parent=1 // pred_check
      _
    $region35: #{tpu_custom_call.1} parent=1 // pred_check_branch
      %67 = sbr.rel (0) target = $region37
    $region36: #{tpu_custom_call.1} parent=1 // pred_region
      %69 = dma.done [#allocation7], 256
    $region37: #{tpu_custom_call.1} parent=1 // pred_fallthru
      _
    // Predicated region
    $region38: #{tpu_custom_call.1} parent=1 // pred_check
      _
    $region39: #{tpu_custom_call.1} parent=1 // pred_check_branch
      %71 = sbr.rel (0) target = $region41
    $region40: #{tpu_custom_call.1} parent=1 // pred_region
      %73 = dma.done [#allocation7], 1024
    $region41: #{tpu_custom_call.1} parent=1 // pred_fallthru
      _
    %v75 = vld [vmem:[#allocation3] sm:$0xff]
    %v76 = vpack.c.bf16 %v75, %v75
    %v77 = vld [vmem:[#allocation6] sm:$0xf]
    %v78 = vld [vmem:[#allocation6 + $0x4] sm:$0xf]
    %v79 = vld [vmem:[#allocation6 + $0x8] sm:$0xf]
    %v80 = vld [vmem:[#allocation6 + $0xc] sm:$0xf]
    %v81 = vld [vmem:[%s2] sm:$0x1]
    %v83 = vperm.slane %v81, 0
    %v89 = vunpack.c.l.b16 %v77
    %v90 = vunpack.c.l.b16 %v78
    %v91 = vunpack.c.l.b16 %v79
    %v92 = vunpack.c.l.b16 %v80
    %v93 = vpack.c.b16 %v90, %v89
    %v94 = vpack.c.b16 %v92, %v91
    %vm97 = vcmask 261120
    %v99 = vsel %vm97, %v76, 0
    %101 = vmatpush.bf16.msra.mxu0 0
    %102 = vmatpush.bf16.msra.mxu0 0
    %103 = vmatpush.bf16.msra.mxu0 0
    %104 = vmatpush.bf16.msra.mxu0 0
    %105 = vmatpush.bf16.msra.mxu0 0
    %106 = vmatpush.bf16.msra.mxu0 0
    %107 = vmatpush.bf16.msra.mxu0 %v94
    %108 = vmatpush.bf16.msra.mxu0 %v93
    %109 = vmatmul.bf16.gmra.mxu0 %v99
    %v110 = vpop.f32.mrf.mxu0
    %v111 = vadd.f32 %v83, %v110
    %v112 = vpop.f32.mrf.mxu0
    %113 = vdwg.mxu0
    %v114 = vtanh.pop %v111
    %v115 = vpack.c.bf16 %v114, %v114
    %v116 = vld [vmem:[#allocation8] sm:$0xf]
    %v117 = vld [vmem:[#allocation8 + $0x4] sm:$0xf]
    %v118 = vld [vmem:[#allocation8 + $0x8] sm:$0xf]
    %v119 = vld [vmem:[#allocation8 + $0xc] sm:$0xf]
    %v120 = vld [vmem:[#allocation8 + $0x10] sm:$0xf]
    %v121 = vld [vmem:[#allocation8 + $0x14] sm:$0xf]
    %v122 = vld [vmem:[#allocation8 + $0x18] sm:$0xf]
    %v123 = vld [vmem:[#allocation8 + $0x1c] sm:$0xf]
    %v124 = vld [vmem:[#allocation8 + $0x20] sm:$0xf]
    %v125 = vld [vmem:[#allocation8 + $0x24] sm:$0xf]
    %v126 = vld [vmem:[#allocation8 + $0x28] sm:$0xf]
    %v127 = vld [vmem:[#allocation8 + $0x2c] sm:$0xf]
    %v128 = vld [vmem:[#allocation8 + $0x30] sm:$0xf]
    %v129 = vld [vmem:[#allocation8 + $0x34] sm:$0xf]
    %v130 = vld [vmem:[#allocation8 + $0x38] sm:$0xf]
    %v131 = vld [vmem:[#allocation8 + $0x3c] sm:$0xf]
    %v132 = vld [vmem:[%s4] sm:$0x1]
    %v134 = vperm.slane %v132, 0
    %v152 = vunpack.c.l.b16 %v116
    %v153 = vunpack.c.l.b16 %v117
    %v154 = vunpack.c.l.b16 %v118
    %v155 = vunpack.c.l.b16 %v119
    %v156 = vunpack.c.l.b16 %v120
    %v157 = vunpack.c.l.b16 %v121
    %v158 = vunpack.c.l.b16 %v122
    %v159 = vunpack.c.l.b16 %v123
    %v160 = vunpack.c.l.b16 %v124
    %v161 = vunpack.c.l.b16 %v125
    %v162 = vunpack.c.l.b16 %v126
    %v163 = vunpack.c.l.b16 %v127
    %v164 = vunpack.c.l.b16 %v128
    %v165 = vunpack.c.l.b16 %v129
    %v166 = vunpack.c.l.b16 %v130
    %v167 = vunpack.c.l.b16 %v131
    %v168 = vpack.c.b16 %v153, %v152
    %v169 = vpack.c.b16 %v155, %v154
    %v170 = vpack.c.b16 %v157, %v156
    %v171 = vpack.c.b16 %v159, %v158
    %v172 = vpack.c.b16 %v161, %v160
    %v173 = vpack.c.b16 %v163, %v162
    %v174 = vpack.c.b16 %v165, %v164
    %v175 = vpack.c.b16 %v167, %v166
    %184 = vmatpush.bf16.msra.mxu0 %v175
    %185 = vmatpush.bf16.msra.mxu0 %v174
    %186 = vmatpush.bf16.msra.mxu0 %v173
    %187 = vmatpush.bf16.msra.mxu0 %v172
    %188 = vmatpush.bf16.msra.mxu0 %v171
    %189 = vmatpush.bf16.msra.mxu0 %v170
    %190 = vmatpush.bf16.msra.mxu0 %v169
    %191 = vmatpush.bf16.msra.mxu0 %v168
    %192 = vmatmul.bf16.gmra.mxu0 %v115
    %v193 = vpop.f32.mrf.mxu0
    %v194 = vadd.f32 %v134, %v193
    %v195 = vpop.f32.mrf.mxu0
    %196 = vdwg.mxu0
    %v197 = vtanh.pop %v194
    %v198 = vld [vmem:[%s5] sm:$0x1]
    %v200 = vperm.slane %v198, 0
    %v202 = vmul.f32 %v197, %v200
    %203 = vadd.xlane.f32.xlu0 %v202
    %v204 = vpop.xlane.xlu0 %203
    %v205 = vld [vmem:[#allocation2] sm:$0x1]
    %207 = vset.pattern.permute.xlu0 0
    %208 = vperm.xlu0 %207, %v205
    %v209 = vpop.permute.xlu0 %208
    %v211 = vperm.slane %v209, 0
    %v212 = vadd.f32 %v204, %v211
    %v214 = vlaneseq
    %v215 = vand.u32 %v214, 127
    %v216 = vperm.slane %v212, %v215
    %vm218 = vcmask 57344
    %219 = vst.msk [vmem:[#allocation9] sm:$0x1] %vm218, %v216
    // Predicated region
    $region42: #{tpu_custom_call.1} parent=1 // pred_check
      _
    $region43: #{tpu_custom_call.1} parent=1 // pred_check_branch
      %221 = sbr.rel (0) target = $region45
    $region44: #{tpu_custom_call.1} parent=1 // pred_region
      %223 = vsyncadd [#allocation5], 0
      %s225 = sshll.u32 [#allocation9], 4
      %s226 = int_to_ptr.vmem [resolvable:$true] %s225
      %s227 = sshll.u32 %s7, 4
      %s228 = int_to_ptr.hbm [resolvable:$true] %s227
      %230 = dma.vmem_to_hbm [thread:$0]  %s226, 16, %s228, [#allocation5]
    $region45: #{tpu_custom_call.1} parent=1 // pred_fallthru
      _
    // Predicated region
    $region46: #{tpu_custom_call.1} parent=1 // pred_check
      _
    $region47: #{tpu_custom_call.1} parent=1 // pred_check_branch
      %232 = sbr.rel (0) target = $region49
    $region48: #{tpu_custom_call.1} parent=1 // pred_region
      %234 = dma.done [#allocation5], 16
    $region49: #{tpu_custom_call.1} parent=1 // pred_fallthru
      _
    %235 = vsyncpa [#allocation4], 1
    %236 = vsyncpa [#allocation7], 1
    %237 = vsyncpa [#allocation5], 1

</llo_original>
